<compile_context>
chip_gen: v6e
topology: v6e:2x2x1
jax: 0.10.0
libtpu: 0.0.40
codegen_flags: <defaults>
</compile_context>

<pallas_src>
import functools

import jax
import jax.numpy as jnp
from jax import lax
from jax.experimental import pallas as pl
from jax.experimental.pallas import tpu as pltpu

_LANE = 128     # lane width: output / N feature dims padded to this
_SUBLANE = 8    # f32 sublane height: batch padded to a multiple of this


def _round_up(x, m):
    return ((x + m - 1) // m) * m


def _fused_mlp_kernel(x_ref, w_ref, b_ref, o_ref, *, layer_dims):
    """Whole MLP in one kernel invocation.

    x_ref: (B_pad, d_in)      unpadded feature dim (real K for layer 0), f32
    w_ref: (L, d_pad, d_pad)  stacked zero-padded weights, (in, out) layout,
                              pre-cast to the compute dtype (bf16 or f32)
    b_ref: (L, 1, d_pad)      stacked zero-padded biases, f32
    o_ref: (B_pad, d_pad)     lane-dense padded output, f32
    """
    num_layers = len(layer_dims) - 1
    compute_dtype = w_ref.dtype
    act = x_ref[...]                                    # (B_pad, d_in) f32
    for i in range(num_layers):                         # static unroll (3 layers)
        k = layer_dims[i]                               # real contraction size
        w = w_ref[i, :k, :]                             # (k, d_pad) static slice
        lhs = act[:, :k].astype(compute_dtype)          # real-K activations
        y = jnp.dot(lhs, w, preferred_element_type=jnp.float32)  # MXU, f32 acc
        y = y + b_ref[i]                                # (1, d_pad) f32 broadcast
        if i < num_layers - 1:
            y = jnp.maximum(y, 0.0)                     # ReLU on all but last
        act = y                                         # (B_pad, d_pad) f32
    o_ref[...] = act.astype(o_ref.dtype)
    # TODO(synk): for deeper/wider configs replace the static unroll with a
    # grid axis over layers (BlockSpec (1, tk, tn), double-buffered weight
    # prefetch, VMEM activation scratch) and size tiles for v7x's 64 MiB VMEM
    # (32 MiB default scoped limit); also add a batch grid axis with
    # dimension_semantics=("parallel",) for large batches on v7x's 2 TCs.


def pack_params(params, *, compute_dtype=jnp.bfloat16):
    """Stack per-layer (w:(in,out), b:(out,)) into zero-padded device slabs.

    Call once and keep the slabs device-resident across forward calls; weights
    are pre-cast to `compute_dtype` here (no in-kernel per-layer cast, halved
    weight DMA for bf16).  Biases stay f32.  Padded rows/cols/lanes are zero,
    which keeps padded output lanes zero (invariant relied upon downstream).
    Returns (w_slab, b_slab, layer_dims) with layer_dims a tuple of real sizes.
    """
    dims = [params[0][0].shape[0]] + [w.shape[1] for w, _ in params]
    d_pad = _round_up(max(dims), _LANE)
    num_layers = len(params)
    w_slab = jnp.zeros((num_layers, d_pad, d_pad), jnp.float32)
    b_slab = jnp.zeros((num_layers, 1, d_pad), jnp.float32)
    for i, (w, b) in enumerate(params):
        d_in, d_out = w.shape
        w_slab = w_slab.at[i, :d_in, :d_out].set(w)
        b_slab = b_slab.at[i, 0, :d_out].set(jnp.reshape(b, (-1,)))
    return w_slab.astype(compute_dtype), b_slab, tuple(int(d) for d in dims)
    # TODO(synk): in a serving loop, additionally hide the slab DMA behind the
    # preceding op via a cross-call prefetch (semaphore + VMEM ref outputs).


@functools.partial(jax.jit, static_argnames=("layer_dims",))
def fused_mlp_forward(x, w_slab, b_slab, layer_dims):
    """Single fused-kernel MLP forward.  x: (B, d_in) -> (B, d_out)."""
    batch, d_in = x.shape
    assert d_in == layer_dims[0]
    num_layers, d_pad, _ = w_slab.shape
    assert num_layers == len(layer_dims) - 1
    b_pad = _round_up(max(batch, _SUBLANE), _SUBLANE)

    if b_pad == batch:
        x_p = x
    else:
        x_p = jnp.zeros((b_pad, d_in), x.dtype).at[:batch].set(x)

    kernel = functools.partial(_fused_mlp_kernel, layer_dims=layer_dims)
    out_pad = pl.pallas_call(
        kernel,
        out_shape=jax.ShapeDtypeStruct((b_pad, d_pad), jnp.float32),
        in_specs=[
            pl.BlockSpec(memory_space=pltpu.MemorySpace.VMEM),  # x (full array)
            pl.BlockSpec(memory_space=pltpu.MemorySpace.VMEM),  # weight slab
            pl.BlockSpec(memory_space=pltpu.MemorySpace.VMEM),  # bias slab
        ],
        out_specs=pl.BlockSpec(memory_space=pltpu.MemorySpace.VMEM),
    )(x_p, w_slab, b_slab)

    return out_pad[:batch, :layer_dims[-1]]


def init_mlp_params(key, input_size, hidden_sizes, output_size,
                    dtype=jnp.float32):
    """Deterministic init matching nn.Linear's default (uniform +-1/sqrt(in)).

    Weights built directly as (in, out) — transposed vs PyTorch — so each
    layer is a plain y = x @ W + b on the MXU.
    """
    sizes = [input_size] + list(hidden_sizes) + [output_size]
    params = []
    for i in range(len(sizes) - 1):
        fan_in, fan_out = sizes[i], sizes[i + 1]
        key, wk, bk = jax.random.split(key, 3)
        bound = 1.0 / jnp.sqrt(fan_in)
        w = jax.random.uniform(wk, (fan_in, fan_out), dtype,
                               minval=-bound, maxval=bound)
        b = jax.random.uniform(bk, (fan_out,), dtype,
                               minval=-bound, maxval=bound)
        params.append((w, b))
    return params


def _reference_forward(x, params):
    n = len(params)
    for i, (w, b) in enumerate(params):
        x = jnp.dot(x, w, precision=lax.Precision.HIGHEST) + b
        if i < n - 1:
            x = jnp.maximum(x, 0.0)
    return x


if __name__ == "__main__":
    key = jax.random.PRNGKey(0)

    batch = 8
    input_size = 32
    hidden_sizes = [64, 64]
    output_size = 16

    key, xk, pk = jax.random.split(key, 3)
    x = jax.random.normal(xk, (batch, input_size), dtype=jnp.float32)
    params = init_mlp_params(pk, input_size, hidden_sizes, output_size)

    ref = _reference_forward(x, params)

    # Correctness path: f32 weight slab, must match the f32 reference tightly.
    w32, b32, dims = pack_params(params, compute_dtype=jnp.float32)
    out_f32 = jax.block_until_ready(fused_mlp_forward(x, w32, b32, dims))
    assert out_f32.shape == (batch, output_size)
    assert jnp.allclose(out_f32, ref, atol=1e-5, rtol=1e-5), "f32 mismatch"

    # Perf path (recommended): bf16 weights/activations, f32 accumulate.
    wbf, bbf, dims = pack_params(params, compute_dtype=jnp.bfloat16)
    out_bf16 = jax.block_until_ready(fused_mlp_forward(x, wbf, bbf, dims))
    assert out_bf16.shape == (batch, output_size)
    assert jnp.allclose(out_bf16, ref, atol=3e-2, rtol=3e-2), "bf16 mismatch"

    print("KERNEL_OK")
</pallas_src>

<mosaic_0001>
module attributes {stable_mosaic.version = 11 : i64} {
  func.func @_fused_mlp_kernel(%arg0: memref<8x32xf32, #tpu.memory_space<vmem>>, %arg1: memref<3x128x128xf32, #tpu.memory_space<vmem>>, %arg2: memref<3x1x128xf32, #tpu.memory_space<vmem>>, %arg3: memref<8x128xf32, #tpu.memory_space<vmem>>) attributes {dimension_semantics = [], scalar_prefetch = 0 : i64, scratch_operands = 0 : i64, tpu.core_type = #tpu.core_type<tc>} {
    %c0 = arith.constant 0 : index
    %c0_0 = arith.constant 0 : index
    %0 = vector.load %arg0[%c0, %c0_0] : memref<8x32xf32, #tpu.memory_space<vmem>>, vector<8x32xf32>
    %c0_1 = arith.constant 0 : index
    %c0_2 = arith.constant 0 : index
    %c0_3 = arith.constant 0 : index
    %1 = vector.load %arg1[%c0_1, %c0_2, %c0_3] : memref<3x128x128xf32, #tpu.memory_space<vmem>>, vector<1x32x128xf32>
    %2 = vector.shape_cast %1 : vector<1x32x128xf32> to vector<32x128xf32>
    %cst = arith.constant dense<0.000000e+00> : vector<8x128xf32>
    %3 = tpu.matmul %0, %2, %cst {dimension_numbers = #tpu.dot_dimension_numbers<[1], [0], [0], [1], [0, 0, 1, 1], [], []>} : vector<8x32xf32>, vector<32x128xf32>, vector<8x128xf32> -> vector<8x128xf32>
    %c0_4 = arith.constant 0 : index
    %c0_5 = arith.constant 0 : index
    %c0_6 = arith.constant 0 : index
    %4 = vector.load %arg2[%c0_4, %c0_5, %c0_6] : memref<3x1x128xf32, #tpu.memory_space<vmem>>, vector<1x1x128xf32>
    %5 = vector.shape_cast %4 : vector<1x1x128xf32> to vector<1x128xf32>
    %6 = vector.broadcast %5 : vector<1x128xf32> to vector<8x128xf32>
    %7 = arith.addf %3, %6 : vector<8x128xf32>
    %cst_7 = arith.constant 0.000000e+00 : f32
    %8 = vector.broadcast %cst_7 : f32 to vector<8x128xf32>
    %9 = arith.maximumf %7, %8 : vector<8x128xf32>
    %c1 = arith.constant 1 : index
    %c0_8 = arith.constant 0 : index
    %c0_9 = arith.constant 0 : index
    %10 = vector.load %arg1[%c1, %c0_8, %c0_9] : memref<3x128x128xf32, #tpu.memory_space<vmem>>, vector<1x64x128xf32>
    %11 = vector.shape_cast %10 : vector<1x64x128xf32> to vector<64x128xf32>
    %12 = vector.extract_strided_slice %9 {offsets = [0, 0], sizes = [8, 64], strides = [1, 1]} : vector<8x128xf32> to vector<8x64xf32>
    %cst_10 = arith.constant dense<0.000000e+00> : vector<8x128xf32>
    %13 = tpu.matmul %12, %11, %cst_10 {dimension_numbers = #tpu.dot_dimension_numbers<[1], [0], [0], [1], [0, 0, 1, 1], [], []>} : vector<8x64xf32>, vector<64x128xf32>, vector<8x128xf32> -> vector<8x128xf32>
    %c1_11 = arith.constant 1 : index
    %c0_12 = arith.constant 0 : index
    %c0_13 = arith.constant 0 : index
    %14 = vector.load %arg2[%c1_11, %c0_12, %c0_13] : memref<3x1x128xf32, #tpu.memory_space<vmem>>, vector<1x1x128xf32>
    %15 = vector.shape_cast %14 : vector<1x1x128xf32> to vector<1x128xf32>
    %16 = vector.broadcast %15 : vector<1x128xf32> to vector<8x128xf32>
    %17 = arith.addf %13, %16 : vector<8x128xf32>
    %cst_14 = arith.constant 0.000000e+00 : f32
    %18 = vector.broadcast %cst_14 : f32 to vector<8x128xf32>
    %19 = arith.maximumf %17, %18 : vector<8x128xf32>
    %c2 = arith.constant 2 : index
    %c0_15 = arith.constant 0 : index
    %c0_16 = arith.constant 0 : index
    %20 = vector.load %arg1[%c2, %c0_15, %c0_16] : memref<3x128x128xf32, #tpu.memory_space<vmem>>, vector<1x64x128xf32>
    %21 = vector.shape_cast %20 : vector<1x64x128xf32> to vector<64x128xf32>
    %22 = vector.extract_strided_slice %19 {offsets = [0, 0], sizes = [8, 64], strides = [1, 1]} : vector<8x128xf32> to vector<8x64xf32>
    %cst_17 = arith.constant dense<0.000000e+00> : vector<8x128xf32>
    %23 = tpu.matmul %22, %21, %cst_17 {dimension_numbers = #tpu.dot_dimension_numbers<[1], [0], [0], [1], [0, 0, 1, 1], [], []>} : vector<8x64xf32>, vector<64x128xf32>, vector<8x128xf32> -> vector<8x128xf32>
    %c2_18 = arith.constant 2 : index
    %c0_19 = arith.constant 0 : index
    %c0_20 = arith.constant 0 : index
    %24 = vector.load %arg2[%c2_18, %c0_19, %c0_20] : memref<3x1x128xf32, #tpu.memory_space<vmem>>, vector<1x1x128xf32>
    %25 = vector.shape_cast %24 : vector<1x1x128xf32> to vector<1x128xf32>
    %26 = vector.broadcast %25 : vector<1x128xf32> to vector<8x128xf32>
    %27 = arith.addf %23, %26 : vector<8x128xf32>
    %c0_21 = arith.constant 0 : index
    %c0_22 = arith.constant 0 : index
    %28 = vector.load %arg3[%c0_21, %c0_22] : memref<8x128xf32, #tpu.memory_space<vmem>>, vector<8x128xf32>
    tpu.vector_store %arg3[%c0_21, %c0_22], %27 {strides = array<i32>} : memref<8x128xf32, #tpu.memory_space<vmem>>, vector<8x128xf32>,
    return
  }
}

</mosaic_0001>

<llo_original>
// kernel: fused_mlp_forward.1
$region0: #{fused_mlp_forward.1}
  #allocation0 [shape = 'u32[]', space=smem, size = 0x4, offset = 0x4, fixed_abs, tag = 'smem constant byte address 0x4 - core index']
  #allocation1 [shape = 'u32[144,128]{1,0:T(1,128)}', space=vmem, size = 0x12000, scoped, tag = 'internal scratch']
  %s0 = inlined_call_operand.hbm [shape: f32[8,32], index: 0, kind: input, shape index: {}]
  %s1 = inlined_call_operand.hbm [shape: f32[3,128,128], index: 1, kind: input, shape index: {}]
  %s2 = inlined_call_operand.vmem [shape: f32[3,1,128], index: 2, kind: input, shape index: {}]
  %s3 = inlined_call_operand.hbm [shape: f32[8,128], index: 3, kind: output, shape index: {}]
  %s4 = sld [smem:[#allocation0]]
  $region30: #{fused_mlp_forward.1} parent=0
    _
  %s6 = ssub.s32 1, %s4
  %s7 = scalar_select 0, %s6, %s4
  $region1: #{fused_mlp_forward.1} parent=0
    #allocation2 [shape = 'u8[4096]{0}', space=vmem, size = 0x1000, scoped, tag = 'input window, operand 0, single buffered']
    #allocation3 [shape = 's32[1]{0}', space=sflag, size = 0x4, scoped, tag = 'scoped memory for fused_mlp_forward.1']
    #allocation4 [shape = 's32[1]{0}', space=sflag, size = 0x4, scoped, tag = 'scoped memory for fused_mlp_forward.1']
    #allocation5 [shape = 'u8[196608]{0}', space=vmem, size = 0x30000, scoped, tag = 'input window, operand 1, single buffered']
    #allocation6 [shape = 's32[1]{0}', space=sflag, size = 0x4, scoped, tag = 'scoped memory for fused_mlp_forward.1']
    #allocation7 [shape = 'u8[4096]{0}', space=vmem, size = 0x1000, scoped, tag = 'output window, operand 0, single buffered']
    %8 = vsyncpa [#allocation3], 0
    %9 = vsyncpa [#allocation6], 0
    %10 = vsyncpa [#allocation4], 0
    // Predicated region
    $region2: #{fused_mlp_forward.1} parent=1 // pred_check
      _
    $region3: #{fused_mlp_forward.1} parent=1 // pred_check_branch
      %12 = sbr.rel (0) target = $region5
    $region4: #{fused_mlp_forward.1} parent=1 // pred_region
      %s14 = ssub.s32 128, 128
      %15 = vsyncadd [#allocation3], %s14
      %s17 = sshll.u32 [#allocation2], 4
      %s18 = int_to_ptr.vmem [resolvable:$true] %s17
      %20 = dma.hbm_to_vmem [thread:$0]  %s0, 128, %s18, [#allocation3]
    $region5: #{fused_mlp_forward.1} parent=1 // pred_fallthru
      _
    // Predicated region
    $region6: #{fused_mlp_forward.1} parent=1 // pred_check
      _
    $region7: #{fused_mlp_forward.1} parent=1 // pred_check_branch
      %22 = sbr.rel (0) target = $region9
    $region8: #{fused_mlp_forward.1} parent=1 // pred_region
      %s24 = ssub.s32 6144, 6144
      %25 = vsyncadd [#allocation6], %s24
      %s26 = sshll.u32 [#allocation5], 4
      %s27 = int_to_ptr.vmem [resolvable:$true] %s26
      %32 = dma.hbm_to_vmem [thread:$0]  %s1, 6144, %s27, [#allocation6], 128, 128, 8
    $region9: #{fused_mlp_forward.1} parent=1 // pred_fallthru
      _
    // Predicated region
    $region10: #{fused_mlp_forward.1} parent=1 // pred_check
      _
    $region11: #{fused_mlp_forward.1} parent=1 // pred_check_branch
      %34 = sbr.rel (0) target = $region13
    $region12: #{fused_mlp_forward.1} parent=1 // pred_region
      _
    $region13: #{fused_mlp_forward.1} parent=1 // pred_fallthru
      _
    // Predicated region
    $region14: #{fused_mlp_forward.1} parent=1 // pred_check
      _
    $region15: #{fused_mlp_forward.1} parent=1 // pred_check_branch
      %36 = sbr.rel (0) target = $region17
    $region16: #{fused_mlp_forward.1} parent=1 // pred_region
      %37 = dma.done [#allocation3], 128
    $region17: #{fused_mlp_forward.1} parent=1 // pred_fallthru
      _
    // Predicated region
    $region18: #{fused_mlp_forward.1} parent=1 // pred_check
      _
    $region19: #{fused_mlp_forward.1} parent=1 // pred_check_branch
      %39 = sbr.rel (0) target = $region21
    $region20: #{fused_mlp_forward.1} parent=1 // pred_region
      %40 = dma.done [#allocation6], 6144
    $region21: #{fused_mlp_forward.1} parent=1 // pred_fallthru
      _
    %v41 = vld [vmem:[#allocation2] sm:$0xff]
    %v42 = vld [vmem:[#allocation5] sm:$0xff]
    %v43 = vld [vmem:[#allocation5 + $0x8] sm:$0xff]
    %v44 = vld [vmem:[#allocation5 + $0x10] sm:$0xff]
    %v45 = vld [vmem:[#allocation5 + $0x18] sm:$0xff]
    %v46 = vld [vmem:[%s2] sm:$0x1]
    %v48 = vlaneseq
    %v49 = vshrl.u32 %v48, 7
    %v50 = vsub.s32 0, %v49
    %v51 = vrot.slane %v46, %v50
    %vm53 = vcmask 261120
    %v55 = vsel %vm53, %v41, 0
    %57 = vmatprep.subr.mxu0 0.0
    %58 = vmatpush1.msra.mxu0 0.0
    %59 = vmatprep.subr.mxu0 0.0
    %60 = vmatpush1.msra.mxu0 0.0
    %61 = vmatprep.subr.mxu0 0.0
    %62 = vmatpush1.msra.mxu0 0.0
    %63 = vmatprep.subr.mxu0 0.0
    %64 = vmatpush1.msra.mxu0 0.0
    %65 = vmatprep.subr.mxu0 0.0
    %66 = vmatpush1.msra.mxu0 0.0
    %67 = vmatprep.subr.mxu0 0.0
    %68 = vmatpush1.msra.mxu0 0.0
    %69 = vmatprep.subr.mxu0 0.0
    %70 = vmatpush1.msra.mxu0 0.0
    %71 = vmatprep.subr.mxu0 0.0
    %72 = vmatpush1.msra.mxu0 0.0
    %73 = vmatprep.subr.mxu0 0.0
    %74 = vmatpush1.msra.mxu0 0.0
    %75 = vmatprep.subr.mxu0 0.0
    %76 = vmatpush1.msra.mxu0 0.0
    %77 = vmatprep.subr.mxu0 0.0
    %78 = vmatpush1.msra.mxu0 0.0
    %79 = vmatprep.subr.mxu0 0.0
    %80 = vmatpush1.msra.mxu0 0.0
    %81 = vmatprep.subr.mxu0 0.0
    %82 = vmatpush1.msra.mxu0 %v45
    %83 = vmatprep.subr.mxu0 0.0
    %84 = vmatpush1.msra.mxu0 %v44
    %85 = vmatprep.subr.mxu0 0.0
    %86 = vmatpush1.msra.mxu0 %v43
    %87 = vmatprep.subr.mxu0 0.0
    %88 = vmatpush1.msra.mxu0 %v42
    %89 = vmatprep.subr.mxu0 0.0
    %90 = vmatpush2.msra.mxu0 0.0
    %91 = vmatprep.subr.mxu0 0.0
    %92 = vmatpush2.msra.mxu0 0.0
    %93 = vmatprep.subr.mxu0 0.0
    %94 = vmatpush2.msra.mxu0 0.0
    %95 = vmatprep.subr.mxu0 0.0
    %96 = vmatpush2.msra.mxu0 0.0
    %97 = vmatprep.subr.mxu0 0.0
    %98 = vmatpush2.msra.mxu0 0.0
    %99 = vmatprep.subr.mxu0 0.0
    %100 = vmatpush2.msra.mxu0 0.0
    %101 = vmatprep.subr.mxu0 0.0
    %102 = vmatpush2.msra.mxu0 0.0
    %103 = vmatprep.subr.mxu0 0.0
    %104 = vmatpush2.msra.mxu0 0.0
    %105 = vmatprep.subr.mxu0 0.0
    %106 = vmatpush2.msra.mxu0 0.0
    %107 = vmatprep.subr.mxu0 0.0
    %108 = vmatpush2.msra.mxu0 0.0
    %109 = vmatprep.subr.mxu0 0.0
    %110 = vmatpush2.msra.mxu0 0.0
    %111 = vmatprep.subr.mxu0 0.0
    %112 = vmatpush2.msra.mxu0 0.0
    %113 = vmatprep.subr.mxu0 0.0
    %114 = vmatpush2.msra.mxu0 0.0
    %115 = vmatprep.subr.mxu0 0.0
    %116 = vmatpush2.msra.mxu0 0.0
    %117 = vmatprep.subr.mxu0 0.0
    %118 = vmatpush2.msra.mxu0 0.0
    %119 = vmatprep.subr.mxu0 0.0
    %120 = vmatpush2.msra.mxu0 0.0
    %121 = vmatprep.mubr.f32.mxu0 0.0
    %122 = vmatmul.mubr.f32.gmra.mxu0 %v55
    %v123 = vpop.f32.mrf.mxu0
    %v124 = vadd.f32 %v51, %v123
    %v125 = vpop.f32.mrf.mxu0
    %126 = vdwg.mxu0
    %v127 = vmax.f32 %v124, 0.0
    %s128 = scalar_lea.vmem [#allocation5], 128
    %v129 = vld [vmem:[%s128] sm:$0xff]
    %v130 = vld [vmem:[%s128 + $0x8] sm:$0xff]
    %v131 = vld [vmem:[%s128 + $0x10] sm:$0xff]
    %v132 = vld [vmem:[%s128 + $0x18] sm:$0xff]
    %v133 = vld [vmem:[%s128 + $0x20] sm:$0xff]
    %v134 = vld [vmem:[%s128 + $0x28] sm:$0xff]
    %v135 = vld [vmem:[%s128 + $0x30] sm:$0xff]
    %v136 = vld [vmem:[%s128 + $0x38] sm:$0xff]
    %s137 = scalar_lea.vmem %s2, 1
    %v138 = vld [vmem:[%s137] sm:$0x1]
    %v140 = vlaneseq
    %v141 = vshrl.u32 %v140, 7
    %v142 = vsub.s32 0, %v141
    %v143 = vrot.slane %v138, %v142
    %vm145 = vcmask 523264
    %v147 = vsel %vm145, %v127, 0
    %149 = vmatprep.subr.mxu0 0.0
    %150 = vmatpush1.msra.mxu0 0.0
    %151 = vmatprep.subr.mxu0 0.0
    %152 = vmatpush1.msra.mxu0 0.0
    %153 = vmatprep.subr.mxu0 0.0
    %154 = vmatpush1.msra.mxu0 0.0
    %155 = vmatprep.subr.mxu0 0.0
    %156 = vmatpush1.msra.mxu0 0.0
    %157 = vmatprep.subr.mxu0 0.0
    %158 = vmatpush1.msra.mxu0 0.0
    %159 = vmatprep.subr.mxu0 0.0
    %160 = vmatpush1.msra.mxu0 0.0
    %161 = vmatprep.subr.mxu0 0.0
    %162 = vmatpush1.msra.mxu0 0.0
    %163 = vmatprep.subr.mxu0 0.0
    %164 = vmatpush1.msra.mxu0 0.0
    %165 = vmatprep.subr.mxu0 0.0
    %166 = vmatpush1.msra.mxu0 %v136
    %167 = vmatprep.subr.mxu0 0.0
    %168 = vmatpush1.msra.mxu0 %v135
    %169 = vmatprep.subr.mxu0 0.0
    %170 = vmatpush1.msra.mxu0 %v134
    %171 = vmatprep.subr.mxu0 0.0
    %172 = vmatpush1.msra.mxu0 %v133
    %173 = vmatprep.subr.mxu0 0.0
    %174 = vmatpush1.msra.mxu0 %v132
    %175 = vmatprep.subr.mxu0 0.0
    %176 = vmatpush1.msra.mxu0 %v131
    %177 = vmatprep.subr.mxu0 0.0
    %178 = vmatpush1.msra.mxu0 %v130
    %179 = vmatprep.subr.mxu0 0.0
    %180 = vmatpush1.msra.mxu0 %v129
    %181 = vmatprep.subr.mxu0 0.0
    %182 = vmatpush2.msra.mxu0 0.0
    %183 = vmatprep.subr.mxu0 0.0
    %184 = vmatpush2.msra.mxu0 0.0
    %185 = vmatprep.subr.mxu0 0.0
    %186 = vmatpush2.msra.mxu0 0.0
    %187 = vmatprep.subr.mxu0 0.0
    %188 = vmatpush2.msra.mxu0 0.0
    %189 = vmatprep.subr.mxu0 0.0
    %190 = vmatpush2.msra.mxu0 0.0
    %191 = vmatprep.subr.mxu0 0.0
    %192 = vmatpush2.msra.mxu0 0.0
    %193 = vmatprep.subr.mxu0 0.0
    %194 = vmatpush2.msra.mxu0 0.0
    %195 = vmatprep.subr.mxu0 0.0
    %196 = vmatpush2.msra.mxu0 0.0
    %197 = vmatprep.subr.mxu0 0.0
    %198 = vmatpush2.msra.mxu0 0.0
    %199 = vmatprep.subr.mxu0 0.0
    %200 = vmatpush2.msra.mxu0 0.0
    %201 = vmatprep.subr.mxu0 0.0
    %202 = vmatpush2.msra.mxu0 0.0
    %203 = vmatprep.subr.mxu0 0.0
    %204 = vmatpush2.msra.mxu0 0.0
    %205 = vmatprep.subr.mxu0 0.0
    %206 = vmatpush2.msra.mxu0 0.0
    %207 = vmatprep.subr.mxu0 0.0
    %208 = vmatpush2.msra.mxu0 0.0
    %209 = vmatprep.subr.mxu0 0.0
    %210 = vmatpush2.msra.mxu0 0.0
    %211 = vmatprep.subr.mxu0 0.0
    %212 = vmatpush2.msra.mxu0 0.0
    %213 = vmatprep.mubr.f32.mxu0 0.0
    %214 = vmatmul.mubr.f32.gmra.mxu0 %v147
    %v215 = vpop.f32.mrf.mxu0
    %v216 = vadd.f32 %v143, %v215
    %v217 = vpop.f32.mrf.mxu0
    %218 = vdwg.mxu0
    %v219 = vmax.f32 %v216, 0.0
    %s220 = scalar_lea.vmem [#allocation5], 256
    %v221 = vld [vmem:[%s220] sm:$0xff]
    %v222 = vld [vmem:[%s220 + $0x8] sm:$0xff]
    %v223 = vld [vmem:[%s220 + $0x10] sm:$0xff]
    %v224 = vld [vmem:[%s220 + $0x18] sm:$0xff]
    %v225 = vld [vmem:[%s220 + $0x20] sm:$0xff]
    %v226 = vld [vmem:[%s220 + $0x28] sm:$0xff]
    %v227 = vld [vmem:[%s220 + $0x30] sm:$0xff]
    %v228 = vld [vmem:[%s220 + $0x38] sm:$0xff]
    %s229 = scalar_lea.vmem %s2, 2
    %v230 = vld [vmem:[%s229] sm:$0x1]
    %v232 = vlaneseq
    %v233 = vshrl.u32 %v232, 7
    %v234 = vsub.s32 0, %v233
    %v235 = vrot.slane %v230, %v234
    %v238 = vsel %vm145, %v219, 0
    %240 = vmatprep.subr.mxu0 0.0
    %241 = vmatpush1.msra.mxu0 0.0
    %242 = vmatprep.subr.mxu0 0.0
    %243 = vmatpush1.msra.mxu0 0.0
    %244 = vmatprep.subr.mxu0 0.0
    %245 = vmatpush1.msra.mxu0 0.0
    %246 = vmatprep.subr.mxu0 0.0
    %247 = vmatpush1.msra.mxu0 0.0
    %248 = vmatprep.subr.mxu0 0.0
    %249 = vmatpush1.msra.mxu0 0.0
    %250 = vmatprep.subr.mxu0 0.0
    %251 = vmatpush1.msra.mxu0 0.0
    %252 = vmatprep.subr.mxu0 0.0
    %253 = vmatpush1.msra.mxu0 0.0
    %254 = vmatprep.subr.mxu0 0.0
    %255 = vmatpush1.msra.mxu0 0.0
    %256 = vmatprep.subr.mxu0 0.0
    %257 = vmatpush1.msra.mxu0 %v228
    %258 = vmatprep.subr.mxu0 0.0
    %259 = vmatpush1.msra.mxu0 %v227
    %260 = vmatprep.subr.mxu0 0.0
    %261 = vmatpush1.msra.mxu0 %v226
    %262 = vmatprep.subr.mxu0 0.0
    %263 = vmatpush1.msra.mxu0 %v225
    %264 = vmatprep.subr.mxu0 0.0
    %265 = vmatpush1.msra.mxu0 %v224
    %266 = vmatprep.subr.mxu0 0.0
    %267 = vmatpush1.msra.mxu0 %v223
    %268 = vmatprep.subr.mxu0 0.0
    %269 = vmatpush1.msra.mxu0 %v222
    %270 = vmatprep.subr.mxu0 0.0
    %271 = vmatpush1.msra.mxu0 %v221
    %272 = vmatprep.subr.mxu0 0.0
    %273 = vmatpush2.msra.mxu0 0.0
    %274 = vmatprep.subr.mxu0 0.0
    %275 = vmatpush2.msra.mxu0 0.0
    %276 = vmatprep.subr.mxu0 0.0
    %277 = vmatpush2.msra.mxu0 0.0
    %278 = vmatprep.subr.mxu0 0.0
    %279 = vmatpush2.msra.mxu0 0.0
    %280 = vmatprep.subr.mxu0 0.0
    %281 = vmatpush2.msra.mxu0 0.0
    %282 = vmatprep.subr.mxu0 0.0
    %283 = vmatpush2.msra.mxu0 0.0
    %284 = vmatprep.subr.mxu0 0.0
    %285 = vmatpush2.msra.mxu0 0.0
    %286 = vmatprep.subr.mxu0 0.0
    %287 = vmatpush2.msra.mxu0 0.0
    %288 = vmatprep.subr.mxu0 0.0
    %289 = vmatpush2.msra.mxu0 0.0
    %290 = vmatprep.subr.mxu0 0.0
    %291 = vmatpush2.msra.mxu0 0.0
    %292 = vmatprep.subr.mxu0 0.0
    %293 = vmatpush2.msra.mxu0 0.0
    %294 = vmatprep.subr.mxu0 0.0
    %295 = vmatpush2.msra.mxu0 0.0
    %296 = vmatprep.subr.mxu0 0.0
    %297 = vmatpush2.msra.mxu0 0.0
    %298 = vmatprep.subr.mxu0 0.0
    %299 = vmatpush2.msra.mxu0 0.0
    %300 = vmatprep.subr.mxu0 0.0
    %301 = vmatpush2.msra.mxu0 0.0
    %302 = vmatprep.subr.mxu0 0.0
    %303 = vmatpush2.msra.mxu0 0.0
    %304 = vmatprep.mubr.f32.mxu0 0.0
    %305 = vmatmul.mubr.f32.gmra.mxu0 %v238
    %v306 = vpop.f32.mrf.mxu0
    %v307 = vadd.f32 %v235, %v306
    %v308 = vpop.f32.mrf.mxu0
    %309 = vdwg.mxu0
    %310 = vst [vmem:[#allocation7] sm:$0xff] %v307
    // Predicated region
    $region22: #{fused_mlp_forward.1} parent=1 // pred_check
      _
    $region23: #{fused_mlp_forward.1} parent=1 // pred_check_branch
      %312 = sbr.rel (0) target = $region25
    $region24: #{fused_mlp_forward.1} parent=1 // pred_region
      %s314 = ssub.s32 128, 128
      %315 = vsyncadd [#allocation4], %s314
      %s317 = sshll.u32 [#allocation7], 4
      %s318 = int_to_ptr.vmem [resolvable:$true] %s317
      %320 = dma.vmem_to_hbm [thread:$0]  %s318, 128, %s3, [#allocation4]
    $region25: #{fused_mlp_forward.1} parent=1 // pred_fallthru
      _
    // Predicated region
    $region26: #{fused_mlp_forward.1} parent=1 // pred_check
      _
    $region27: #{fused_mlp_forward.1} parent=1 // pred_check_branch
      %322 = sbr.rel (0) target = $region29
    $region28: #{fused_mlp_forward.1} parent=1 // pred_region
      %323 = dma.done [#allocation4], 128
    $region29: #{fused_mlp_forward.1} parent=1 // pred_fallthru
      _
    %324 = vsyncpa [#allocation3], 1
    %325 = vsyncpa [#allocation6], 1
    %326 = vsyncpa [#allocation4], 1

</llo_original>
